<compile_context>
chip_gen: v6e
topology: v6e:2x2x1
jax: 0.10.0
libtpu: 0.0.40
codegen_flags: <defaults>
</compile_context>

<pallas_src>
import jax
import jax.numpy as jnp
from jax import lax
from jax.experimental import pallas as pl
from jax.experimental.pallas import tpu as pltpu


def _mhsa_kernel(x_ref, wm_ref, wq_ref, o_ref):
    x = x_ref[0]              # (L, D)   float32 -- query == context == batch_vectors[b]
    wm = wm_ref[...]          # (D, H*D) float32 -- stacked "mix" half of all head weights
    wq = wq_ref[...]          # (D, H*D) float32 -- stacked "query" half of all head weights

    L, D = x.shape
    HD = wm.shape[-1]
    H = HD // D               # static Python int (trace time)

    # attention_scores = x @ x.T, contracted on the feature dim (no explicit transpose).
    scores = lax.dot_general(
        x, x,
        dimension_numbers=(((1,), (1,)), ((), ())),
        preferred_element_type=jnp.float32)                    # (L, L)

    # numerically-stable softmax over the last dim
    m = jnp.max(scores, axis=-1, keepdims=True)
    p = jnp.exp(scores - m)
    denom = jnp.sum(p, axis=-1, keepdims=True)
    attn = p * pl.reciprocal(denom, approx=False)              # exact; keeps 1e-5 tol

    # mix = attention_weights @ context
    mix = jnp.dot(attn, x, preferred_element_type=jnp.float32)  # (L, D)

    # All heads in one lane-dense matmul pair:
    #   out_all[:, h*D:(h+1)*D] = tanh( mix @ W_h[:, :D].T + x @ W_h[:, D:].T )
    out_all = jnp.tanh(
        jnp.dot(mix, wm, preferred_element_type=jnp.float32)
        + jnp.dot(x, wq, preferred_element_type=jnp.float32))   # (L, H*D)

    # Average across heads: sum the H static D-wide lane slices, scale by 1/H.
    acc = out_all[:, 0:D]
    for h in range(1, H):
        acc = acc + out_all[:, h * D:(h + 1) * D]
    o_ref[0] = (acc * (1.0 / H)).astype(o_ref.dtype)
    # NOTE: output last dim is D=32 (<128 lanes); kept as-is rather than an in-kernel
    # (L,D)->(1,L*D) relayout to guarantee clean lowering at these tiny shapes.


def multihead_self_attention(batch_vectors, w_stack):
    """batch_vectors: (B, L, D); w_stack: (H, D, 2D) per-head nn.Linear weights.

    Returns (avg_seq_logits, None) matching MultiheadSelfAttentionModel.forward.
    """
    B, L, D = batch_vectors.shape
    H = w_stack.shape[0]

    # Trace-time weight restacking (free layout plumbing, outside the kernel):
    #   W_mix_all[k, h*D + j] = w_stack[h, j, k]        (first  half of W_h, transposed)
    #   W_qry_all[k, h*D + j] = w_stack[h, j, D + k]    (second half of W_h, transposed)
    w_mix_all = jnp.transpose(w_stack[:, :, :D], (2, 0, 1)).reshape(D, H * D)
    w_qry_all = jnp.transpose(w_stack[:, :, D:], (2, 0, 1)).reshape(D, H * D)

    out = pl.pallas_call(
        _mhsa_kernel,
        out_shape=jax.ShapeDtypeStruct((B, L, D), batch_vectors.dtype),
        grid_spec=pltpu.PrefetchScalarGridSpec(
            num_scalar_prefetch=0,
            grid=(B,),
            in_specs=[
                pl.BlockSpec((1, L, D), lambda b: (b, 0, 0)),      # x[b]
                pl.BlockSpec((D, H * D), lambda b: (0, 0)),        # W_mix_all (resident)
                pl.BlockSpec((D, H * D), lambda b: (0, 0)),        # W_qry_all (resident)
            ],
            out_specs=pl.BlockSpec((1, L, D), lambda b: (b, 0, 0)),
        ),
        compiler_params=pltpu.CompilerParams(
            dimension_semantics=("parallel",)),   # B=2 maps onto v7x's 2 TensorCores
    )(batch_vectors, w_mix_all, w_qry_all)
    return out, None


def _reference(batch_vectors, w_stack):
    """Pure-JAX reference matching the PyTorch forward."""
    B, L, D = batch_vectors.shape
    H = w_stack.shape[0]
    acc = jnp.zeros((B, L, D), jnp.float32)
    for h in range(H):
        x = batch_vectors
        scores = jnp.einsum("bld,bkd->blk", x, x)
        attn = jax.nn.softmax(scores, axis=-1)
        mix = jnp.einsum("blk,bkd->bld", attn, x)
        combined = jnp.concatenate([mix, x], axis=-1)              # (B, L, 2D)
        out_h = jnp.tanh(jnp.einsum("blc,dc->bld", combined, w_stack[h]))
        acc = acc + out_h
    return acc / H


if __name__ == "__main__":
    B, L, D, H = 2, 8, 32, 4

    key = jax.random.PRNGKey(0)
    kx, kw = jax.random.split(key)
    batch_vectors = jax.random.normal(kx, (B, L, D), dtype=jnp.float32)
    # nn.Linear(2D, D) default init: uniform(-1/sqrt(2D), 1/sqrt(2D))
    bound = 1.0 / (2 * D) ** 0.5
    w_stack = jax.random.uniform(kw, (H, D, 2 * D), dtype=jnp.float32,
                                 minval=-bound, maxval=bound)

    out, _ = multihead_self_attention(batch_vectors, w_stack)
    out = jax.block_until_ready(out)

    ref = _reference(batch_vectors, w_stack)
    assert out.shape == (B, L, D)
    assert jnp.allclose(out, ref, atol=1e-5, rtol=1e-5), "mismatch vs reference"

    print("KERNEL_OK")
</pallas_src>

<mosaic_0001>
module attributes {stable_mosaic.version = 11 : i64} {
  func.func @_mhsa_kernel(%arg0: i32, %arg1: memref<1x8x32xf32, #tpu.memory_space<vmem>>, %arg2: memref<32x128xf32, #tpu.memory_space<vmem>>, %arg3: memref<32x128xf32, #tpu.memory_space<vmem>>, %arg4: memref<1x8x32xf32, #tpu.memory_space<vmem>>) attributes {dimension_semantics = [#tpu.dimension_semantics<parallel>], iteration_bounds = array<i64: 2>, scalar_prefetch = 0 : i64, scratch_operands = 0 : i64, tpu.core_type = #tpu.core_type<tc>, window_params = [{transform_indices = @transform_0, window_bounds = array<i64: 1, 8, 32>}, {pipeline_mode = #tpu.pipeline_mode<synchronous>, transform_indices = @transform_1, window_bounds = array<i64: 32, 128>}, {pipeline_mode = #tpu.pipeline_mode<synchronous>, transform_indices = @transform_2, window_bounds = array<i64: 32, 128>}, {transform_indices = @transform_3, window_bounds = array<i64: 1, 8, 32>}]} {
    %c0 = arith.constant 0 : index
    %c0_0 = arith.constant 0 : index
    %c0_1 = arith.constant 0 : index
    %0 = vector.load %arg1[%c0, %c0_0, %c0_1] : memref<1x8x32xf32, #tpu.memory_space<vmem>>, vector<1x8x32xf32>
    %1 = vector.shape_cast %0 : vector<1x8x32xf32> to vector<8x32xf32>
    %c0_2 = arith.constant 0 : index
    %c0_3 = arith.constant 0 : index
    %2 = vector.load %arg2[%c0_2, %c0_3] : memref<32x128xf32, #tpu.memory_space<vmem>>, vector<32x128xf32>
    %c0_4 = arith.constant 0 : index
    %c0_5 = arith.constant 0 : index
    %3 = vector.load %arg3[%c0_4, %c0_5] : memref<32x128xf32, #tpu.memory_space<vmem>>, vector<32x128xf32>
    %cst = arith.constant dense<0.000000e+00> : vector<8x8xf32>
    %4 = tpu.matmul %1, %1, %cst {dimension_numbers = #tpu.dot_dimension_numbers<[1], [1], [0], [0], [0, 0, 1, 0], [], []>} : vector<8x32xf32>, vector<8x32xf32>, vector<8x8xf32> -> vector<8x8xf32>
    %cst_6 = arith.constant dense<0xFF800000> : vector<8xf32>
    %5 = vector.multi_reduction <maximumf>, %4, %cst_6 [1] : vector<8x8xf32> to vector<8xf32>
    %6 = vector.shape_cast %5 : vector<8xf32> to vector<8x1xf32>
    %7 = vector.broadcast %6 : vector<8x1xf32> to vector<8x8xf32>
    %8 = arith.subf %4, %7 : vector<8x8xf32>
    %9 = math.exp %8 : vector<8x8xf32>
    %cst_7 = arith.constant dense<0.000000e+00> : vector<8xf32>
    %10 = vector.multi_reduction <add>, %9, %cst_7 [1] : vector<8x8xf32> to vector<8xf32>
    %11 = vector.shape_cast %10 : vector<8xf32> to vector<8x1xf32>
    %12 = tpu.reciprocal %11 : vector<8x1xf32> -> vector<8x1xf32>
    %13 = vector.broadcast %12 : vector<8x1xf32> to vector<8x8xf32>
    %14 = arith.mulf %9, %13 : vector<8x8xf32>
    %cst_8 = arith.constant dense<0.000000e+00> : vector<8x32xf32>
    %15 = tpu.matmul %14, %1, %cst_8 {dimension_numbers = #tpu.dot_dimension_numbers<[1], [0], [0], [1], [0, 0, 1, 1], [], []>} : vector<8x8xf32>, vector<8x32xf32>, vector<8x32xf32> -> vector<8x32xf32>
    %cst_9 = arith.constant dense<0.000000e+00> : vector<8x128xf32>
    %16 = tpu.matmul %15, %2, %cst_9 {dimension_numbers = #tpu.dot_dimension_numbers<[1], [0], [0], [1], [0, 0, 1, 1], [], []>} : vector<8x32xf32>, vector<32x128xf32>, vector<8x128xf32> -> vector<8x128xf32>
    %cst_10 = arith.constant dense<0.000000e+00> : vector<8x128xf32>
    %17 = tpu.matmul %1, %3, %cst_10 {dimension_numbers = #tpu.dot_dimension_numbers<[1], [0], [0], [1], [0, 0, 1, 1], [], []>} : vector<8x32xf32>, vector<32x128xf32>, vector<8x128xf32> -> vector<8x128xf32>
    %18 = arith.addf %16, %17 : vector<8x128xf32>
    %19 = math.tanh %18 : vector<8x128xf32>
    %20 = vector.extract_strided_slice %19 {offsets = [0, 0], sizes = [8, 32], strides = [1, 1]} : vector<8x128xf32> to vector<8x32xf32>
    %21 = vector.extract_strided_slice %19 {offsets = [0, 32], sizes = [8, 32], strides = [1, 1]} : vector<8x128xf32> to vector<8x32xf32>
    %22 = arith.addf %20, %21 : vector<8x32xf32>
    %23 = vector.extract_strided_slice %19 {offsets = [0, 64], sizes = [8, 32], strides = [1, 1]} : vector<8x128xf32> to vector<8x32xf32>
    %24 = arith.addf %22, %23 : vector<8x32xf32>
    %25 = vector.extract_strided_slice %19 {offsets = [0, 96], sizes = [8, 32], strides = [1, 1]} : vector<8x128xf32> to vector<8x32xf32>
    %26 = arith.addf %24, %25 : vector<8x32xf32>
    %cst_11 = arith.constant 2.500000e-01 : f32
    %27 = vector.broadcast %cst_11 : f32 to vector<8x32xf32>
    %28 = arith.mulf %26, %27 : vector<8x32xf32>
    %c0_12 = arith.constant 0 : index
    %c0_13 = arith.constant 0 : index
    %c0_14 = arith.constant 0 : index
    %29 = vector.load %arg4[%c0_12, %c0_13, %c0_14] : memref<1x8x32xf32, #tpu.memory_space<vmem>>, vector<1x8x32xf32>
    %30 = vector.shape_cast %29 : vector<1x8x32xf32> to vector<8x32xf32>
    %31 = vector.shape_cast %28 : vector<8x32xf32> to vector<1x8x32xf32>
    tpu.vector_store %arg4[%c0_12, %c0_13, %c0_14], %31 {strides = array<i32>} : memref<1x8x32xf32, #tpu.memory_space<vmem>>, vector<1x8x32xf32>,
    return
  }
  func.func @transform_0(%arg0: i32) -> (i32, i32, i32) {
    %c0_i32 = arith.constant 0 : i32
    %c0_i32_0 = arith.constant 0 : i32
    %c0_i32_1 = arith.constant 0 : i32
    return %arg0, %c0_i32, %c0_i32_0 : i32, i32, i32
  }
  func.func @transform_1(%arg0: i32) -> (i32, i32) {
    %c0_i32 = arith.constant 0 : i32
    %c0_i32_0 = arith.constant 0 : i32
    %c0_i32_1 = arith.constant 0 : i32
    return %c0_i32, %c0_i32_0 : i32, i32
  }
  func.func @transform_2(%arg0: i32) -> (i32, i32) {
    %c0_i32 = arith.constant 0 : i32
    %c0_i32_0 = arith.constant 0 : i32
    %c0_i32_1 = arith.constant 0 : i32
    return %c0_i32, %c0_i32_0 : i32, i32
  }
  func.func @transform_3(%arg0: i32) -> (i32, i32, i32) {
    %c0_i32 = arith.constant 0 : i32
    %c0_i32_0 = arith.constant 0 : i32
    %c0_i32_1 = arith.constant 0 : i32
    return %arg0, %c0_i32, %c0_i32_0 : i32, i32, i32
  }
}

</mosaic_0001>

<llo_original>
// kernel: tpu_custom_call.1
$region0: #{tpu_custom_call.1}
  #allocation0 [shape = 'u32[]', space=smem, size = 0x4, offset = 0x4, fixed_abs, tag = 'smem constant byte address 0x4 - core index']
  #allocation1 [shape = 'u32[144,128]{1,0:T(1,128)}', space=vmem, size = 0x12000, scoped, tag = 'internal scratch']
  %s0 = inlined_call_operand.hbm [shape: f32[2,8,32], index: 0, kind: input, shape index: {}]
  %s1 = inlined_call_operand.hbm [shape: f32[32,128], index: 1, kind: input, shape index: {}]
  %s2 = inlined_call_operand.hbm [shape: f32[32,128], index: 2, kind: input, shape index: {}]
  %s3 = inlined_call_operand.hbm [shape: f32[2,8,32], index: 3, kind: output, shape index: {}]
  %s4 = sld [smem:[#allocation0]]
  $region57: #{tpu_custom_call.1} parent=0
    _
  %s6 = ssub.s32 1, %s4
  %s7 = scalar_select 0, %s6, %s4
  $region1: #{tpu_custom_call.1} parent=0
    #allocation2 [shape = 'u8[8192]{0}', space=vmem, size = 0x2000, scoped, tag = 'input window, operand 0']
    #allocation3 [shape = 's32[2]{0}', space=sflag, size = 0x8, scoped, tag = 'scoped memory for tpu_custom_call.1']
    #allocation4 [shape = 's32[2]{0}', space=sflag, size = 0x8, scoped, tag = 'scoped memory for tpu_custom_call.1']
    #allocation5 [shape = 'u8[16384]{0}', space=vmem, size = 0x4000, scoped, tag = 'input window, operand 1, single buffered']
    #allocation6 [shape = 's32[1]{0}', space=sflag, size = 0x4, scoped, tag = 'scoped memory for tpu_custom_call.1']
    #allocation7 [shape = 'u8[16384]{0}', space=vmem, size = 0x4000, scoped, tag = 'input window, operand 2, single buffered']
    #allocation8 [shape = 'u8[8192]{0}', space=vmem, size = 0x2000, scoped, tag = 'output window, operand 0']
    %8 = vsyncpa [#allocation3], 0
    %s9 = scalar_lea.sflag [#allocation3], 1
    %10 = vsyncpa %s9, 0
    %11 = vsyncpa [#allocation6], 0
    %12 = vsyncpa [#allocation4], 0
    %s13 = scalar_lea.sflag [#allocation4], 1
    %14 = vsyncpa %s13, 0
    loop: start=0, step=1, limit=4
    $region2: #{tpu_custom_call.1} parent=1 // loop_pre_header
      _
    $region3: #{tpu_custom_call.1} parent=1 // loop_header
      %s16 = sphi 0, %s20
      %p17 = scmp.ge.s32.totalorder %s16, 4
      %s26 = sphi 0, %s28
      %s29 = sphi 0, %s26
      %s30 = sphi 0, %s29
      %s46 = sphi 0, %s30
      %s50 = sphi 0, %s50
      %s52 = sphi 0, %s50
      %s53 = sphi 0, %s52
      %s67 = sphi 0, %s53
      %s71 = sphi 0, %s71
      %s73 = sphi 0, %s71
      %s74 = sphi 0, %s73
      %s88 = sphi 0, %s74
      %s94 = sphi 0, %s96
      %s97 = sphi 0, %s94
      %s98 = sphi 0, %s97
      %s114 = sphi 0, %s98
    $region4: #{tpu_custom_call.1} parent=1 // loop_header_branch
      %19 = sbr.rel (%p17) target = $region8
    $region5: #{tpu_custom_call.1} parent=1 // loop_body
      %s21 = ssub.s32 %s16, 1
      %s22 = ssub.s32 %s16, 2
      %s23 = sadd.s32 %s16, 1
      %s24 = ssub.s32 %s16, %s23
      %p25 = scmp.eq.s32.totalorder %s24, 0
      %s27 = sadd.s32 %s26, 1
      %s28 = scalar_select %p25, %s26, %s27
      %p31 = pneg %p25
      %p32 = scmp.eq.s32.totalorder %s16, 1
      %p33 = por %p31, %p32
      %p34 = scmp.ne.s32.totalorder %s26, %s29
      %p35 = scmp.eq.s32.totalorder %s16, 0
      %p36 = por %p34, %p35
      %p37 = scmp.ne.s32.totalorder %s26, %s29
      %p38 = scmp.eq.s32.totalorder %s21, 1
      %p39 = por %p37, %p38
      %p40 = scmp.ne.s32.totalorder %s29, %s30
      %p41 = scmp.eq.s32.totalorder %s21, 0
      %p42 = por %p40, %p41
      %p43 = scmp.ne.s32.totalorder %s29, %s30
      %p44 = scmp.eq.s32.totalorder %s22, 1
      %p45 = por %p43, %p44
      %p47 = scmp.ne.s32.totalorder %s30, %s46
      %p48 = scmp.eq.s32.totalorder %s22, 0
      %p49 = por %p47, %p48
      %s51 = sadd.s32 %s50, 1
      %p54 = scmp.eq.s32.totalorder %s16, 1
      %p55 = scmp.ne.s32.totalorder %s50, %s52
      %p56 = scmp.eq.s32.totalorder %s16, 0
      %p57 = por %p55, %p56
      %p58 = scmp.ne.s32.totalorder %s50, %s52
      %p59 = scmp.eq.s32.totalorder %s21, 1
      %p60 = por %p58, %p59
      %p61 = scmp.ne.s32.totalorder %s52, %s53
      %p62 = scmp.eq.s32.totalorder %s21, 0
      %p63 = por %p61, %p62
      %p64 = scmp.ne.s32.totalorder %s52, %s53
      %p65 = scmp.eq.s32.totalorder %s22, 1
      %p66 = por %p64, %p65
      %p68 = scmp.ne.s32.totalorder %s53, %s67
      %p69 = scmp.eq.s32.totalorder %s22, 0
      %p70 = por %p68, %p69
      %s72 = sadd.s32 %s71, 1
      %p75 = scmp.eq.s32.totalorder %s16, 1
      %p76 = scmp.ne.s32.totalorder %s71, %s73
      %p77 = scmp.eq.s32.totalorder %s16, 0
      %p78 = por %p76, %p77
      %p79 = scmp.ne.s32.totalorder %s71, %s73
      %p80 = scmp.eq.s32.totalorder %s21, 1
      %p81 = por %p79, %p80
      %p82 = scmp.ne.s32.totalorder %s73, %s74
      %p83 = scmp.eq.s32.totalorder %s21, 0
      %p84 = por %p82, %p83
      %p85 = scmp.ne.s32.totalorder %s73, %s74
      %p86 = scmp.eq.s32.totalorder %s22, 1
      %p87 = por %p85, %p86
      %p89 = scmp.ne.s32.totalorder %s74, %s88
      %p90 = scmp.eq.s32.totalorder %s22, 0
      %p91 = por %p89, %p90
      %s92 = ssub.s32 %s16, %s23
      %p93 = scmp.eq.s32.totalorder %s92, 0
      %s95 = sadd.s32 %s94, 1
      %s96 = scalar_select %p93, %s94, %s95
      %p99 = pneg %p93
      %p100 = scmp.eq.s32.totalorder %s16, 1
      %p101 = por %p99, %p100
      %p102 = scmp.ne.s32.totalorder %s94, %s97
      %p103 = scmp.eq.s32.totalorder %s16, 0
      %p104 = por %p102, %p103
      %p105 = scmp.ne.s32.totalorder %s94, %s97
      %p106 = scmp.eq.s32.totalorder %s21, 1
      %p107 = por %p105, %p106
      %p108 = scmp.ne.s32.totalorder %s97, %s98
      %p109 = scmp.eq.s32.totalorder %s21, 0
      %p110 = por %p108, %p109
      %p111 = scmp.ne.s32.totalorder %s97, %s98
      %p112 = scmp.eq.s32.totalorder %s22, 1
      %p113 = por %p111, %p112
      %p115 = scmp.ne.s32.totalorder %s98, %s114
      %p116 = scmp.eq.s32.totalorder %s22, 0
      %p117 = por %p115, %p116
      %p118 = scmp.le.s32.totalorder 1, %s16
      %p119 = scmp.lt.s32.totalorder %s16, 3
      %p120 = pnand %p118, %p119
      %p121 = pneg %p120
      // Predicated region
      $region9: #{tpu_custom_call.1} parent=5 // pred_check
        _
      $region10: #{tpu_custom_call.1} parent=5 // pred_check_branch
        %123 = sbr.rel (%p120) target = $region12
      $region11: #{tpu_custom_call.1} parent=5 // pred_region
        %s124 = ssub.s32 %s16, 1
        // Predicated region
        $region13: #{tpu_custom_call.1} parent=11 // pred_check
          %p125 = pneg %p63
        $region14: #{tpu_custom_call.1} parent=11 // pred_check_branch
          %127 = sbr.rel (%p125) target = $region16
        $region15: #{tpu_custom_call.1} parent=11 // pred_region
          %s129 = ssub.s32 512, 512
          %130 = vsyncadd [#allocation6], %s129
          %s131 = sshll.u32 [#allocation5], 4
          %s132 = int_to_ptr.vmem [resolvable:$true] %s131
          %137 = dma.hbm_to_vmem [thread:$0]  %s1, 512, %s132, [#allocation6], 128, 128, 8
        $region16: #{tpu_custom_call.1} parent=11 // pred_fallthru
          _
        // Predicated region
        $region17: #{tpu_custom_call.1} parent=11 // pred_check
          %p138 = pneg %p84
        $region18: #{tpu_custom_call.1} parent=11 // pred_check_branch
          %140 = sbr.rel (%p138) target = $region20
        $region19: #{tpu_custom_call.1} parent=11 // pred_region
          %s142 = ssub.s32 512, 512
          %143 = vsyncadd [#allocation6], %s142
          %s144 = sshll.u32 [#allocation7], 4
          %s145 = int_to_ptr.vmem [resolvable:$true] %s144
          %150 = dma.hbm_to_vmem [thread:$0]  %s2, 512, %s145, [#allocation6], 128, 128, 8
        $region20: #{tpu_custom_call.1} parent=11 // pred_fallthru
          _
      $region12: #{tpu_custom_call.1} parent=5 // pred_fallthru
        _
      %p151 = scmp.lt.s32.totalorder %s16, 2
      // Predicated region
      $region21: #{tpu_custom_call.1} parent=5 // pred_check
        %p152 = pneg %p151
      $region22: #{tpu_custom_call.1} parent=5 // pred_check_branch
        %154 = sbr.rel (%p152) target = $region24
      $region23: #{tpu_custom_call.1} parent=5 // pred_region
        // Predicated region
        $region25: #{tpu_custom_call.1} parent=23 // pred_check
          %p155 = pneg %p36
        $region26: #{tpu_custom_call.1} parent=23 // pred_check_branch
          %157 = sbr.rel (%p155) target = $region28
        $region27: #{tpu_custom_call.1} parent=23 // pred_region
          %s158 = sand.u32 %s26, 1
          %s159 = scalar_lea.sflag [#allocation3], %s158
          %s160 = sand.u32 %s26, 1
          %s161 = smul.addr %s160, 8
          %s162 = scalar_lea.vmem [#allocation2], %s161
          %s164 = ssub.s32 128, 128
          %165 = vsyncadd %s159, %s164
          %s166 = smul.addr %s16, 128
          %s167 = scalar_lea.hbm %s0, %s166
          %s169 = sshll.u32 %s162, 4
          %s170 = int_to_ptr.vmem [resolvable:$true] %s169
          %172 = dma.hbm_to_vmem [thread:$0]  %s167, 128, %s170, %s159
        $region28: #{tpu_custom_call.1} parent=23 // pred_fallthru
          _
      $region24: #{tpu_custom_call.1} parent=5 // pred_fallthru
        _
      %p173 = scmp.le.s32.totalorder 1, %s16
      %p174 = scmp.lt.s32.totalorder %s16, 3
      %p175 = pnand %p173, %p174
      %p176 = pneg %p175
      // Predicated region
      $region29: #{tpu_custom_call.1} parent=5 // pred_check
        _
      $region30: #{tpu_custom_call.1} parent=5 // pred_check_branch
        %178 = sbr.rel (%p175) target = $region32
      $region31: #{tpu_custom_call.1} parent=5 // pred_region
        %s179 = ssub.s32 %s16, 1
        %s180 = sand.u32 %s29, 1
        %s181 = scalar_lea.sflag [#allocation3], %s180
        %s182 = sand.u32 %s29, 1
        %s183 = smul.addr %s182, 8
        %s184 = scalar_lea.vmem [#allocation2], %s183
        // Predicated region
        $region33: #{tpu_custom_call.1} parent=31 // pred_check
          %p185 = pneg %p42
        $region34: #{tpu_custom_call.1} parent=31 // pred_check_branch
          %187 = sbr.rel (%p185) target = $region36
        $region35: #{tpu_custom_call.1} parent=31 // pred_region
          %188 = dma.done %s181, 128
        $region36: #{tpu_custom_call.1} parent=31 // pred_fallthru
          _
        // Predicated region
        $region37: #{tpu_custom_call.1} parent=31 // pred_check
          %p189 = pneg %p63
        $region38: #{tpu_custom_call.1} parent=31 // pred_check_branch
          %191 = sbr.rel (%p189) target = $region40
        $region39: #{tpu_custom_call.1} parent=31 // pred_region
          %192 = dma.done [#allocation6], 512
        $region40: #{tpu_custom_call.1} parent=31 // pred_fallthru
          _
        // Predicated region
        $region41: #{tpu_custom_call.1} parent=31 // pred_check
          %p193 = pneg %p84
        $region42: #{tpu_custom_call.1} parent=31 // pred_check_branch
          %195 = sbr.rel (%p193) target = $region44
        $region43: #{tpu_custom_call.1} parent=31 // pred_region
          %196 = dma.done [#allocation6], 512
        $region44: #{tpu_custom_call.1} parent=31 // pred_fallthru
          _
        %s197 = sand.u32 %s29, 1
        %s198 = scalar_lea.sflag [#allocation3], %s197
        %s199 = sand.u32 %s29, 1
        %s200 = smul.addr %s199, 8
        %s201 = scalar_lea.vmem [#allocation2], %s200
        %p202 = pneg %p42
        %p203 = pneg %p39
        %p204 = pneg %p63
        %p205 = pneg %p60
        %p206 = pneg %p84
        %p207 = pneg %p81
        %p208 = pneg %p110
        %p209 = pneg %p107
        %s210 = sand.u32 %s97, 1
        %s211 = scalar_lea.sflag [#allocation4], %s210
        %s212 = sand.u32 %s97, 1
        %s213 = smul.addr %s212, 8
        %s214 = scalar_lea.vmem [#allocation8], %s213
        %v215 = vld [vmem:[%s184] sm:$0xff]
        %v216 = vld [vmem:[#allocation5] sm:$0xff]
        %v217 = vld [vmem:[#allocation5 + $0x8] sm:$0xff]
        %v218 = vld [vmem:[#allocation5 + $0x10] sm:$0xff]
        %v219 = vld [vmem:[#allocation5 + $0x18] sm:$0xff]
        %v220 = vld [vmem:[#allocation7] sm:$0xff]
        %v221 = vld [vmem:[#allocation7 + $0x8] sm:$0xff]
        %v222 = vld [vmem:[#allocation7 + $0x10] sm:$0xff]
        %v223 = vld [vmem:[#allocation7 + $0x18] sm:$0xff]
        %vm224 = vcmask 261120
        %v226 = vsel %vm224, %v215, 0
        %228 = vmatprep.subr.mxu0 0.0
        %229 = vmatpush1.xpose.msra.mxu0 0.0
        %230 = vmatprep.subr.mxu0 0.0
        %231 = vmatpush1.xpose.msra.mxu0 0.0
        %232 = vmatprep.subr.mxu0 0.0
        %233 = vmatpush1.xpose.msra.mxu0 0.0
        %234 = vmatprep.subr.mxu0 0.0
        %235 = vmatpush1.xpose.msra.mxu0 0.0
        %236 = vmatprep.subr.mxu0 0.0
        %237 = vmatpush1.xpose.msra.mxu0 0.0
        %238 = vmatprep.subr.mxu0 0.0
        %239 = vmatpush1.xpose.msra.mxu0 0.0
        %240 = vmatprep.subr.mxu0 0.0
        %241 = vmatpush1.xpose.msra.mxu0 0.0
        %242 = vmatprep.subr.mxu0 0.0
        %243 = vmatpush1.xpose.msra.mxu0 0.0
        %244 = vmatprep.subr.mxu0 0.0
        %245 = vmatpush1.xpose.msra.mxu0 0.0
        %246 = vmatprep.subr.mxu0 0.0
        %247 = vmatpush1.xpose.msra.mxu0 0.0
        %248 = vmatprep.subr.mxu0 0.0
        %249 = vmatpush1.xpose.msra.mxu0 0.0
        %250 = vmatprep.subr.mxu0 0.0
        %251 = vmatpush1.xpose.msra.mxu0 0.0
        %252 = vmatprep.subr.mxu0 0.0
        %253 = vmatpush1.xpose.msra.mxu0 0.0
        %254 = vmatprep.subr.mxu0 0.0
        %255 = vmatpush1.xpose.msra.mxu0 0.0
        %256 = vmatprep.subr.mxu0 0.0
        %257 = vmatpush1.xpose.msra.mxu0 0.0
        %258 = vmatprep.subr.mxu0 0.0
        %259 = vmatpush1.xpose.msra.mxu0 %v226
        %260 = vmatprep.subr.mxu0 0.0
        %261 = vmatpush2.xpose.msra.mxu0 0.0
        %262 = vmatprep.subr.mxu0 0.0
        %263 = vmatpush2.xpose.msra.mxu0 0.0
        %264 = vmatprep.subr.mxu0 0.0
        %265 = vmatpush2.xpose.msra.mxu0 0.0
        %266 = vmatprep.subr.mxu0 0.0
        %267 = vmatpush2.xpose.msra.mxu0 0.0
        %268 = vmatprep.subr.mxu0 0.0
        %269 = vmatpush2.xpose.msra.mxu0 0.0
        %270 = vmatprep.subr.mxu0 0.0
        %271 = vmatpush2.xpose.msra.mxu0 0.0
        %272 = vmatprep.subr.mxu0 0.0
        %273 = vmatpush2.xpose.msra.mxu0 0.0
        %274 = vmatprep.subr.mxu0 0.0
        %275 = vmatpush2.xpose.msra.mxu0 0.0
        %276 = vmatprep.subr.mxu0 0.0
        %277 = vmatpush2.xpose.msra.mxu0 0.0
        %278 = vmatprep.subr.mxu0 0.0
        %279 = vmatpush2.xpose.msra.mxu0 0.0
        %280 = vmatprep.subr.mxu0 0.0
        %281 = vmatpush2.xpose.msra.mxu0 0.0
        %282 = vmatprep.subr.mxu0 0.0
        %283 = vmatpush2.xpose.msra.mxu0 0.0
        %284 = vmatprep.subr.mxu0 0.0
        %285 = vmatpush2.xpose.msra.mxu0 0.0
        %286 = vmatprep.subr.mxu0 0.0
        %287 = vmatpush2.xpose.msra.mxu0 0.0
        %288 = vmatprep.subr.mxu0 0.0
        %289 = vmatpush2.xpose.msra.mxu0 0.0
        %290 = vmatprep.subr.mxu0 0.0
        %291 = vmatpush2.xpose.msra.mxu0 0.0
        %292 = vmatprep.mubr.f32.mxu0 0.0
        %293 = vmatmul.mubr.f32.gmra.mxu0 %v226
        %v294 = vpop.f32.mrf.mxu0
        %v295 = vadd.f32 0.0, %v294
        %v296 = vpop.f32.mrf.mxu0
        %297 = vdwg.mxu0
        %vm298 = vcmask 64512
        %v299 = vsel %vm298, %v295, -inf
        %300 = vmax.xlane.f32.xlu0 %v299
        %v301 = vpop.xlane.xlu0 %300
        %v302 = vsub.f32 %v295, %v301
        %v303 = vmul.f32 %v302, 1.442695
        %v304 = vpow.pop %v303
        %v305 = vsel %vm298, %v304, 0.0
        %306 = vadd.xlane.f32.xlu0 %v305
        %v307 = vpop.xlane.xlu0 %306
        %v308 = vrcp.pop %v307
        %v309 = vmul.f32 %v304, %v308
        %v311 = vsel %vm298, %v309, 0
        %313 = vmatprep.subr.mxu0 0.0
        %314 = vmatpush1.msra.mxu0 0.0
        %315 = vmatprep.subr.mxu0 0.0
        %316 = vmatpush1.msra.mxu0 0.0
        %317 = vmatprep.subr.mxu0 0.0
        %318 = vmatpush1.msra.mxu0 0.0
        %319 = vmatprep.subr.mxu0 0.0
        %320 = vmatpush1.msra.mxu0 0.0
        %321 = vmatprep.subr.mxu0 0.0
        %322 = vmatpush1.msra.mxu0 0.0
        %323 = vmatprep.subr.mxu0 0.0
        %324 = vmatpush1.msra.mxu0 0.0
        %325 = vmatprep.subr.mxu0 0.0
        %326 = vmatpush1.msra.mxu0 0.0
        %327 = vmatprep.subr.mxu0 0.0
        %328 = vmatpush1.msra.mxu0 0.0
        %329 = vmatprep.subr.mxu0 0.0
        %330 = vmatpush1.msra.mxu0 0.0
        %331 = vmatprep.subr.mxu0 0.0
        %332 = vmatpush1.msra.mxu0 0.0
        %333 = vmatprep.subr.mxu0 0.0
        %334 = vmatpush1.msra.mxu0 0.0
        %335 = vmatprep.subr.mxu0 0.0
        %336 = vmatpush1.msra.mxu0 0.0
        %337 = vmatprep.subr.mxu0 0.0
        %338 = vmatpush1.msra.mxu0 0.0
        %339 = vmatprep.subr.mxu0 0.0
        %340 = vmatpush1.msra.mxu0 0.0
        %341 = vmatprep.subr.mxu0 0.0
        %342 = vmatpush1.msra.mxu0 0.0
        %343 = vmatprep.subr.mxu0 0.0
        %344 = vmatpush1.msra.mxu0 %v215
        %345 = vmatprep.subr.mxu0 0.0
        %346 = vmatpush2.msra.mxu0 0.0
        %347 = vmatprep.subr.mxu0 0.0
        %348 = vmatpush2.msra.mxu0 0.0
        %349 = vmatprep.subr.mxu0 0.0
        %350 = vmatpush2.msra.mxu0 0.0
        %351 = vmatprep.subr.mxu0 0.0
        %352 = vmatpush2.msra.mxu0 0.0
        %353 = vmatprep.subr.mxu0 0.0
        %354 = vmatpush2.msra.mxu0 0.0
        %355 = vmatprep.subr.mxu0 0.0
        %356 = vmatpush2.msra.mxu0 0.0
        %357 = vmatprep.subr.mxu0 0.0
        %358 = vmatpush2.msra.mxu0 0.0
        %359 = vmatprep.subr.mxu0 0.0
        %360 = vmatpush2.msra.mxu0 0.0
        %361 = vmatprep.subr.mxu0 0.0
        %362 = vmatpush2.msra.mxu0 0.0
        %363 = vmatprep.subr.mxu0 0.0
        %364 = vmatpush2.msra.mxu0 0.0
        %365 = vmatprep.subr.mxu0 0.0
        %366 = vmatpush2.msra.mxu0 0.0
        %367 = vmatprep.subr.mxu0 0.0
        %368 = vmatpush2.msra.mxu0 0.0
        %369 = vmatprep.subr.mxu0 0.0
        %370 = vmatpush2.msra.mxu0 0.0
        %371 = vmatprep.subr.mxu0 0.0
        %372 = vmatpush2.msra.mxu0 0.0
        %373 = vmatprep.subr.mxu0 0.0
        %374 = vmatpush2.msra.mxu0 0.0
        %375 = vmatprep.subr.mxu0 0.0
        %376 = vmatpush2.msra.mxu0 0.0
        %377 = vmatprep.mubr.f32.mxu0 0.0
        %378 = vmatmul.mubr.f32.gmra.mxu0 %v311
        %v379 = vpop.f32.mrf.mxu0
        %v380 = vadd.f32 0.0, %v379
        %v381 = vpop.f32.mrf.mxu0
        %382 = vdwg.mxu0
        %383 = vmatprep.subr.mxu0 0.0
        %384 = vmatpush1.msra.mxu0 0.0
        %385 = vmatprep.subr.mxu0 0.0
        %386 = vmatpush1.msra.mxu0 0.0
        %387 = vmatprep.subr.mxu0 0.0
        %388 = vmatpush1.msra.mxu0 0.0
        %389 = vmatprep.subr.mxu0 0.0
        %390 = vmatpush1.msra.mxu0 0.0
        %391 = vmatprep.subr.mxu0 0.0
        %392 = vmatpush1.msra.mxu0 0.0
        %393 = vmatprep.subr.mxu0 0.0
        %394 = vmatpush1.msra.mxu0 0.0
        %395 = vmatprep.subr.mxu0 0.0
        %396 = vmatpush1.msra.mxu0 0.0
        %397 = vmatprep.subr.mxu0 0.0
        %398 = vmatpush1.msra.mxu0 0.0
        %399 = vmatprep.subr.mxu0 0.0
        %400 = vmatpush1.msra.mxu0 0.0
        %401 = vmatprep.subr.mxu0 0.0
        %402 = vmatpush1.msra.mxu0 0.0
        %403 = vmatprep.subr.mxu0 0.0
        %404 = vmatpush1.msra.mxu0 0.0
        %405 = vmatprep.subr.mxu0 0.0
        %406 = vmatpush1.msra.mxu0 0.0
        %407 = vmatprep.subr.mxu0 0.0
        %408 = vmatpush1.msra.mxu0 %v223
        %409 = vmatprep.subr.mxu0 0.0
        %410 = vmatpush1.msra.mxu0 %v222
        %411 = vmatprep.subr.mxu0 0.0
        %412 = vmatpush1.msra.mxu0 %v221
        %413 = vmatprep.subr.mxu0 0.0
        %414 = vmatpush1.msra.mxu0 %v220
        %415 = vmatprep.subr.mxu0 0.0
        %416 = vmatpush2.msra.mxu0 0.0
        %417 = vmatprep.subr.mxu0 0.0
        %418 = vmatpush2.msra.mxu0 0.0
        %419 = vmatprep.subr.mxu0 0.0
        %420 = vmatpush2.msra.mxu0 0.0
        %421 = vmatprep.subr.mxu0 0.0
        %422 = vmatpush2.msra.mxu0 0.0
        %423 = vmatprep.subr.mxu0 0.0
        %424 = vmatpush2.msra.mxu0 0.0
        %425 = vmatprep.subr.mxu0 0.0
        %426 = vmatpush2.msra.mxu0 0.0
        %427 = vmatprep.subr.mxu0 0.0
        %428 = vmatpush2.msra.mxu0 0.0
        %429 = vmatprep.subr.mxu0 0.0
        %430 = vmatpush2.msra.mxu0 0.0
        %431 = vmatprep.subr.mxu0 0.0
        %432 = vmatpush2.msra.mxu0 0.0
        %433 = vmatprep.subr.mxu0 0.0
        %434 = vmatpush2.msra.mxu0 0.0
        %435 = vmatprep.subr.mxu0 0.0
        %436 = vmatpush2.msra.mxu0 0.0
        %437 = vmatprep.subr.mxu0 0.0
        %438 = vmatpush2.msra.mxu0 0.0
        %439 = vmatprep.subr.mxu0 0.0
        %440 = vmatpush2.msra.mxu0 0.0
        %441 = vmatprep.subr.mxu0 0.0
        %442 = vmatpush2.msra.mxu0 0.0
        %443 = vmatprep.subr.mxu0 0.0
        %444 = vmatpush2.msra.mxu0 0.0
        %445 = vmatprep.subr.mxu0 0.0
        %446 = vmatpush2.msra.mxu0 0.0
        %447 = vmatprep.mubr.f32.mxu0 0.0
        %448 = vmatmul.mubr.f32.gmra.mxu0 %v226
        %v449 = vpop.f32.mrf.mxu0
        %v450 = vadd.f32 0.0, %v449
        %v451 = vpop.f32.mrf.mxu0
        %452 = vdwg.mxu0
        %v454 = vsel %vm224, %v380, 0
        %456 = vmatprep.subr.mxu0 0.0
        %457 = vmatpush1.msra.mxu0 0.0
        %458 = vmatprep.subr.mxu0 0.0
        %459 = vmatpush1.msra.mxu0 0.0
        %460 = vmatprep.subr.mxu0 0.0
        %461 = vmatpush1.msra.mxu0 0.0
        %462 = vmatprep.subr.mxu0 0.0
        %463 = vmatpush1.msra.mxu0 0.0
        %464 = vmatprep.subr.mxu0 0.0
        %465 = vmatpush1.msra.mxu0 0.0
        %466 = vmatprep.subr.mxu0 0.0
        %467 = vmatpush1.msra.mxu0 0.0
        %468 = vmatprep.subr.mxu0 0.0
        %469 = vmatpush1.msra.mxu0 0.0
        %470 = vmatprep.subr.mxu0 0.0
        %471 = vmatpush1.msra.mxu0 0.0
        %472 = vmatprep.subr.mxu0 0.0
        %473 = vmatpush1.msra.mxu0 0.0
        %474 = vmatprep.subr.mxu0 0.0
        %475 = vmatpush1.msra.mxu0 0.0
        %476 = vmatprep.subr.mxu0 0.0
        %477 = vmatpush1.msra.mxu0 0.0
        %478 = vmatprep.subr.mxu0 0.0
        %479 = vmatpush1.msra.mxu0 0.0
        %480 = vmatprep.subr.mxu0 0.0
        %481 = vmatpush1.msra.mxu0 %v219
        %482 = vmatprep.subr.mxu0 0.0
        %483 = vmatpush1.msra.mxu0 %v218
        %484 = vmatprep.subr.mxu0 0.0
        %485 = vmatpush1.msra.mxu0 %v217
        %486 = vmatprep.subr.mxu0 0.0
        %487 = vmatpush1.msra.mxu0 %v216
        %488 = vmatprep.subr.mxu0 0.0
        %489 = vmatpush2.msra.mxu0 0.0
        %490 = vmatprep.subr.mxu0 0.0
        %491 = vmatpush2.msra.mxu0 0.0
        %492 = vmatprep.subr.mxu0 0.0
        %493 = vmatpush2.msra.mxu0 0.0
        %494 = vmatprep.subr.mxu0 0.0
        %495 = vmatpush2.msra.mxu0 0.0
        %496 = vmatprep.subr.mxu0 0.0
        %497 = vmatpush2.msra.mxu0 0.0
        %498 = vmatprep.subr.mxu0 0.0
        %499 = vmatpush2.msra.mxu0 0.0
        %500 = vmatprep.subr.mxu0 0.0
        %501 = vmatpush2.msra.mxu0 0.0
        %502 = vmatprep.subr.mxu0 0.0
        %503 = vmatpush2.msra.mxu0 0.0
        %504 = vmatprep.subr.mxu0 0.0
        %505 = vmatpush2.msra.mxu0 0.0
        %506 = vmatprep.subr.mxu0 0.0
        %507 = vmatpush2.msra.mxu0 0.0
        %508 = vmatprep.subr.mxu0 0.0
        %509 = vmatpush2.msra.mxu0 0.0
        %510 = vmatprep.subr.mxu0 0.0
        %511 = vmatpush2.msra.mxu0 0.0
        %512 = vmatprep.subr.mxu0 0.0
        %513 = vmatpush2.msra.mxu0 0.0
        %514 = vmatprep.subr.mxu0 0.0
        %515 = vmatpush2.msra.mxu0 0.0
        %516 = vmatprep.subr.mxu0 0.0
        %517 = vmatpush2.msra.mxu0 0.0
        %518 = vmatprep.subr.mxu0 0.0
        %519 = vmatpush2.msra.mxu0 0.0
        %520 = vmatprep.mubr.f32.mxu0 0.0
        %521 = vmatmul.mubr.f32.gmra.mxu0 %v454
        %v522 = vpop.f32.mrf.mxu0
        %v523 = vadd.f32 %v450, %v522
        %v524 = vpop.f32.mrf.mxu0
        %525 = vdwg.mxu0
        %v526 = vtanh.pop %v523
        %528 = vrot.lane.b32.xlu0 %v526, 96
        %v529 = vpop.permute.xlu0 %528
        %v531 = vadd.f32 %v526, %v529
        %532 = vrot.lane.b32.xlu0 %v526, 64
        %v533 = vpop.permute.xlu0 %532
        %v535 = vadd.f32 %v531, %v533
        %536 = vrot.lane.b32.xlu0 %v526, 32
        %v537 = vpop.permute.xlu0 %536
        %v539 = vadd.f32 %v535, %v537
        %v540 = vmul.f32 %v539, 0.25
        %541 = vst.msk [vmem:[%s214] sm:$0xff] %vm224, %v540
        %s542 = sand.u32 %s97, 1
        %s543 = scalar_lea.sflag [#allocation4], %s542
        %s544 = sand.u32 %s97, 1
        %s545 = smul.addr %s544, 8
        %s546 = scalar_lea.vmem [#allocation8], %s545
        // Predicated region
        $region45: #{tpu_custom_call.1} parent=31 // pred_check
          %p547 = pneg %p107
        $region46: #{tpu_custom_call.1} parent=31 // pred_check_branch
          %549 = sbr.rel (%p547) target = $region48
        $region47: #{tpu_custom_call.1} parent=31 // pred_region
          %s551 = ssub.s32 128, 128
          %552 = vsyncadd %s543, %s551
          %s553 = smul.addr %s21, 128
          %s554 = scalar_lea.hbm %s3, %s553
          %s556 = sshll.u32 %s546, 4
          %s557 = int_to_ptr.vmem [resolvable:$true] %s556
          %559 = dma.vmem_to_hbm [thread:$0]  %s557, 128, %s554, %s543
        $region48: #{tpu_custom_call.1} parent=31 // pred_fallthru
          _
      $region32: #{tpu_custom_call.1} parent=5 // pred_fallthru
        _
      %p560 = scmp.le.s32.totalorder 2, %s16
      // Predicated region
      $region49: #{tpu_custom_call.1} parent=5 // pred_check
        %p561 = pneg %p560
      $region50: #{tpu_custom_call.1} parent=5 // pred_check_branch
        %563 = sbr.rel (%p561) target = $region52
      $region51: #{tpu_custom_call.1} parent=5 // pred_region
        %s564 = ssub.s32 %s16, 2
        // Predicated region
        $region53: #{tpu_custom_call.1} parent=51 // pred_check
          %p565 = pneg %p113
        $region54: #{tpu_custom_call.1} parent=51 // pred_check_branch
          %567 = sbr.rel (%p565) target = $region56
        $region55: #{tpu_custom_call.1} parent=51 // pred_region
          %s568 = sand.u32 %s98, 1
          %s569 = scalar_lea.sflag [#allocation4], %s568
          %s570 = sand.u32 %s98, 1
          %s571 = smul.addr %s570, 8
          %s572 = scalar_lea.vmem [#allocation8], %s571
          %573 = dma.done %s569, 128
        $region56: #{tpu_custom_call.1} parent=51 // pred_fallthru
          _
      $region52: #{tpu_custom_call.1} parent=5 // pred_fallthru
        _
    $region6: #{tpu_custom_call.1} parent=1 // loop_footer
      %s20 = sadd.s32 1, %s16
    $region7: #{tpu_custom_call.1} parent=1 // loop_footer_branch
      %15 = sbr.rel target = $region3
    $region8: #{tpu_custom_call.1} parent=1 // loop_exit
      _
    %574 = vsyncpa [#allocation3], 1
    %s575 = scalar_lea.sflag [#allocation3], 1
    %576 = vsyncpa %s575, 1
    %577 = vsyncpa [#allocation6], 1
    %578 = vsyncpa [#allocation4], 1
    %s579 = scalar_lea.sflag [#allocation4], 1
    %580 = vsyncpa %s579, 1

</llo_original>
